<compile_context>
chip_gen: v6e
topology: v6e:2x2x1
jax: 0.10.0
libtpu: 0.0.40
codegen_flags: <defaults>
</compile_context>

<pallas_src>
import jax
import jax.numpy as jnp
from jax.experimental import pallas as pl
from jax.experimental.pallas import tpu as pltpu

LANES = 128
SUBLANES = 8
MAX_BLOCK_ROWS = 8192          # (8192,128) f32 = 4 MiB per input per buffer
SLAB_ROWS = 512                # inner-loop slab size: bounds Mosaic temporaries
_PAD_SENTINEL = -1.0e4         # sigmoid->0, max(x,0)->0, log1p(exp(-|x|))->0


def _num_tensorcores():
    # 2 TensorCores per chip only on v7x-class parts; v5e/v6e are single-TC.
    # Returning 1 when unsure is always safe (just no core split).
    try:
        kind = jax.devices()[0].device_kind.lower()
    except Exception:
        return 1
    return 2 if ("v7" in kind or kind.startswith("tpu7")) else 1


def _make_kernel(rows, block_rows, blocks_per_core, needs_edge, edge_start,
                 slab_rows):
    num_slabs = block_rows // slab_rows      # static
    rem_rows = block_rows % slab_rows        # static; multiple of SUBLANES

    def kernel(x_ref, t_ref, o_ref):
        c = pl.program_id(0)      # core-split axis ("parallel")
        i = pl.program_id(1)      # reduction axis ("arbitrary")

        @pl.when(i == 0)
        def _():
            o_ref[...] = jnp.zeros_like(o_ref)

        def slab_sums(start, nrows, row0, masked):
            x = x_ref[pl.ds(start, nrows), :].astype(jnp.float32)
            t = t_ref[pl.ds(start, nrows), :].astype(jnp.float32)
            # One shared exp feeds both sigmoid and the stable BCE log term.
            e = jnp.exp(-jnp.abs(x))
            d = 1.0 + e
            r = pl.reciprocal(d, approx=True)     # EUP vrcp (slot has slack)
            r = r * (2.0 - d * r)                 # one Newton step: ~1e-7 rel
            sig = jnp.where(x >= 0, 1.0, e) * r
            bce = jnp.maximum(x, 0.0) - x * t + jnp.log1p(e)
            if masked:
                # Select-style masking (not multiplicative): also scrubs any
                # NaN/Inf coming from the uninitialized OOB region.
                rid = row0 + start + jax.lax.broadcasted_iota(
                    jnp.int32, (nrows, LANES), 0)
                valid = rid < rows
                zero = jnp.zeros_like(x)
                sig = jnp.where(valid, sig, zero)
                t = jnp.where(valid, t, zero)
                bce = jnp.where(valid, bce, zero)

            def fold(v):   # (nrows,128) -> (8,128) partial sums, pure VPU adds
                return jnp.sum(v.reshape(nrows // SUBLANES, SUBLANES, LANES),
                               axis=0)

            return fold(sig * t), fold(sig), fold(t), fold(bce)

        def accumulate(masked, row0):
            zeros8 = jnp.zeros((SUBLANES, LANES), jnp.float32)
            acc = (zeros8, zeros8, zeros8, zeros8)

            def add(a, b):
                return tuple(u + v for u, v in zip(a, b))

            if num_slabs > 1:
                def body(s, a):
                    start = pl.multiple_of(s * slab_rows, slab_rows)
                    return add(a, slab_sums(start, slab_rows, row0, masked))
                acc = jax.lax.fori_loop(0, num_slabs, body, acc)
            elif num_slabs == 1:
                acc = add(acc, slab_sums(0, slab_rows, row0, masked))
            if rem_rows:
                acc = add(acc, slab_sums(num_slabs * slab_rows, rem_rows,
                                         row0, masked))

            o_ref[0, 0] += acc[0]   # intersection: sum(sigmoid(x) * t)
            o_ref[0, 1] += acc[1]   # sum(sigmoid(x))
            o_ref[0, 2] += acc[2]   # sum(t)
            o_ref[0, 3] += acc[3]   # sum of per-element BCE-with-logits

        if not needs_edge:
            accumulate(False, 0)
        else:
            b = c * blocks_per_core + i

            @pl.when(b < edge_start)        # interior blocks: no mask at all
            def _():
                accumulate(False, 0)

            @pl.when(b >= edge_start)       # partial-last / phantom blocks
            def _():
                accumulate(True, b * block_rows)

    return kernel


def dice_bce_loss(inputs, targets, smooth=1.0):
    """Returns (BCE, dice_loss) matching PyTorch DiceBCELoss.forward."""
    x = jnp.ravel(inputs)          # keep native dtype; kernel casts per-slab
    t = jnp.ravel(targets)
    n = x.shape[0]

    chunk = SUBLANES * LANES
    if n % chunk != 0:
        # Rare fallback: pad with a sentinel logit so padded elements
        # contribute exactly zero to every partial sum.  Aligned sizes (the
        # common case) take the zero-copy path above.
        # TODO(synk): for large unaligned inputs a memory_space=pl.ANY manual
        # DMA path would avoid copying both streams here.
        pad = (-n) % chunk
        x = jnp.pad(x, (0, pad), constant_values=_PAD_SENTINEL)
        t = jnp.pad(t, (0, pad), constant_values=0)

    rows = x.shape[0] // LANES            # multiple of SUBLANES
    x2 = x.reshape(rows, LANES)
    t2 = t.reshape(rows, LANES)

    num_cores = _num_tensorcores()
    block_rows = min(MAX_BLOCK_ROWS, rows)
    num_blocks = -(-rows // block_rows)
    blocks_per_core = -(-num_blocks // num_cores)
    partial_last = (rows % block_rows) != 0
    needs_edge = partial_last or (num_cores * blocks_per_core != num_blocks)
    edge_start = (num_blocks - 1) if partial_last else num_blocks

    def row_block_index(c, i):
        # Clamp phantom blocks (from cdiv rounding across cores) onto the last
        # real block; their contribution is zeroed by the in-kernel mask.
        return (jnp.minimum(c * blocks_per_core + i, num_blocks - 1), 0)

    in_spec = pl.BlockSpec((block_rows, LANES), row_block_index)
    out_spec = pl.BlockSpec((1, 4, SUBLANES, LANES), lambda c, i: (c, 0, 0, 0))

    kernel = _make_kernel(rows, block_rows, blocks_per_core, needs_edge,
                          edge_start, min(SLAB_ROWS, block_rows))

    partials = pl.pallas_call(
        kernel,
        out_shape=jax.ShapeDtypeStruct((num_cores, 4, SUBLANES, LANES),
                                       jnp.float32),
        grid_spec=pltpu.PrefetchScalarGridSpec(
            num_scalar_prefetch=0,
            grid=(num_cores, blocks_per_core),
            in_specs=[in_spec, in_spec],
            out_specs=out_spec,
        ),
        compiler_params=pltpu.CompilerParams(
            # TODO(synk): on v7x verify the leading "parallel" axis shards
            # across both TensorCores; if not, switch to pltpu.CORE_PARALLEL.
            dimension_semantics=("parallel", "arbitrary"),
            # 8192-row double-buffered input pipeline = 16 MiB, above v5e's
            # 16 MiB scoped default; 32 MiB is safe on every generation.
            vmem_limit_bytes=32 * 1024 * 1024),
    )(x2, t2)

    # Tiny final cross-core / cross-lane reduction in plain JAX.
    sums = jnp.sum(partials, axis=(0, 2, 3))
    intersection, sig_sum, tgt_sum, bce_sum = sums[0], sums[1], sums[2], sums[3]
    dice_loss = 1.0 - (2.0 * intersection + smooth) / (sig_sum + tgt_sum + smooth)
    bce = bce_sum / jnp.float32(n)
    return bce, dice_loss


def _reference(inputs, targets, smooth=1.0):
    x = jnp.ravel(inputs).astype(jnp.float32)
    t = jnp.ravel(targets).astype(jnp.float32)
    s = jax.nn.sigmoid(x)
    inter = jnp.sum(s * t)
    dice = 1.0 - (2.0 * inter + smooth) / (jnp.sum(s) + jnp.sum(t) + smooth)
    bce = jnp.mean(jnp.maximum(x, 0.0) - x * t + jnp.log1p(jnp.exp(-jnp.abs(x))))
    return bce, dice


if __name__ == "__main__":
    key = jax.random.PRNGKey(0)
    k1, k2, k3, k4 = jax.random.split(key, 4)

    # Aligned (zero-copy) case: NCHW logits + binary targets, 2048 elements.
    inputs = jax.random.normal(k1, (2, 4, 16, 16), dtype=jnp.float32)
    targets = (jax.random.uniform(k2, (2, 4, 16, 16)) > 0.5).astype(jnp.float32)
    bce, dice = dice_bce_loss(inputs, targets, smooth=1.0)
    jax.block_until_ready((bce, dice))
    bce_ref, dice_ref = _reference(inputs, targets, smooth=1.0)
    assert jnp.allclose(bce, bce_ref, atol=1e-5, rtol=1e-5), (bce, bce_ref)
    assert jnp.allclose(dice, dice_ref, atol=1e-5, rtol=1e-5), (dice, dice_ref)

    # Unaligned case (600 elements) exercising the sentinel-pad fallback.
    inputs2 = jax.random.normal(k3, (2, 3, 10, 10), dtype=jnp.float32)
    targets2 = (jax.random.uniform(k4, (2, 3, 10, 10)) > 0.5).astype(jnp.float32)
    bce2, dice2 = dice_bce_loss(inputs2, targets2, smooth=1.0)
    jax.block_until_ready((bce2, dice2))
    bce2_ref, dice2_ref = _reference(inputs2, targets2, smooth=1.0)
    assert jnp.allclose(bce2, bce2_ref, atol=1e-5, rtol=1e-5), (bce2, bce2_ref)
    assert jnp.allclose(dice2, dice2_ref, atol=1e-5, rtol=1e-5), (dice2, dice2_ref)

    print("KERNEL_OK")
</pallas_src>

<mosaic_0001>
module attributes {stable_mosaic.version = 11 : i64} {
  func.func @kernel(%arg0: i32, %arg1: i32, %arg2: memref<16x128xf32, #tpu.memory_space<vmem>>, %arg3: memref<16x128xf32, #tpu.memory_space<vmem>>, %arg4: memref<1x4x8x128xf32, #tpu.memory_space<vmem>>) attributes {dimension_semantics = [#tpu.dimension_semantics<parallel>, #tpu.dimension_semantics<arbitrary>], iteration_bounds = array<i64: 1, 1>, scalar_prefetch = 0 : i64, scratch_operands = 0 : i64, tpu.core_type = #tpu.core_type<tc>, window_params = [{transform_indices = @transform_0, window_bounds = array<i64: 16, 128>}, {transform_indices = @transform_1, window_bounds = array<i64: 16, 128>}, {transform_indices = @transform_2, window_bounds = array<i64: 1, 4, 8, 128>}]} {
    %c0_i32 = arith.constant 0 : i32
    %0 = arith.cmpi eq, %arg1, %c0_i32 : i32
    %1 = arith.extui %0 : i1 to i32
    %c0_i32_0 = arith.constant 0 : i32
    %2 = arith.cmpi ne, %1, %c0_i32_0 : i32
    scf.if %2 {
      %cst_43 = arith.constant 0.000000e+00 : f32
      %65 = vector.broadcast %cst_43 : f32 to vector<1x4x8x128xf32>
      %c0_44 = arith.constant 0 : index
      %c0_45 = arith.constant 0 : index
      %c0_46 = arith.constant 0 : index
      %c0_47 = arith.constant 0 : index
      %66 = vector.load %arg4[%c0_44, %c0_45, %c0_46, %c0_47] : memref<1x4x8x128xf32, #tpu.memory_space<vmem>>, vector<1x4x8x128xf32>
      tpu.vector_store %arg4[%c0_44, %c0_45, %c0_46, %c0_47], %65 {strides = array<i32>} : memref<1x4x8x128xf32, #tpu.memory_space<vmem>>, vector<1x4x8x128xf32>,
    } else {
    }
    %cst = arith.constant 0.000000e+00 : f32
    %3 = vector.broadcast %cst : f32 to vector<8x128xf32>
    %c0 = arith.constant 0 : index
    %c0_1 = arith.constant 0 : index
    %4 = vector.load %arg2[%c0, %c0_1] : memref<16x128xf32, #tpu.memory_space<vmem>>, vector<16x128xf32>
    %c0_2 = arith.constant 0 : index
    %c0_3 = arith.constant 0 : index
    %5 = vector.load %arg3[%c0_2, %c0_3] : memref<16x128xf32, #tpu.memory_space<vmem>>, vector<16x128xf32>
    %6 = math.absf %4 : vector<16x128xf32>
    %cst_4 = arith.constant 0.000000e+00 : f32
    %7 = vector.broadcast %cst_4 : f32 to vector<16x128xf32>
    %8 = arith.subf %7, %6 : vector<16x128xf32>
    %9 = math.exp %8 : vector<16x128xf32>
    %cst_5 = arith.constant 1.000000e+00 : f32
    %10 = vector.broadcast %cst_5 : f32 to vector<16x128xf32>
    %11 = arith.addf %10, %9 : vector<16x128xf32>
    %12 = tpu.reciprocal %11 {approx = true} : vector<16x128xf32> -> vector<16x128xf32>
    %13 = arith.mulf %11, %12 : vector<16x128xf32>
    %cst_6 = arith.constant 2.000000e+00 : f32
    %14 = vector.broadcast %cst_6 : f32 to vector<16x128xf32>
    %15 = arith.subf %14, %13 : vector<16x128xf32>
    %16 = arith.mulf %12, %15 : vector<16x128xf32>
    %cst_7 = arith.constant 0.000000e+00 : f32
    %17 = vector.broadcast %cst_7 : f32 to vector<16x128xf32>
    %18 = arith.cmpf oge, %4, %17 : vector<16x128xf32>
    %cst_8 = arith.constant 1.000000e+00 : f32
    %19 = vector.broadcast %cst_8 : f32 to vector<16x128xf32>
    %20 = arith.select %18, %19, %9 : vector<16x128xi1>, vector<16x128xf32>
    %21 = arith.mulf %20, %16 : vector<16x128xf32>
    %cst_9 = arith.constant 0.000000e+00 : f32
    %22 = vector.broadcast %cst_9 : f32 to vector<16x128xf32>
    %23 = arith.maximumf %4, %22 : vector<16x128xf32>
    %24 = arith.mulf %4, %5 : vector<16x128xf32>
    %25 = arith.subf %23, %24 : vector<16x128xf32>
    %26 = math.log1p %9 : vector<16x128xf32>
    %27 = arith.addf %25, %26 : vector<16x128xf32>
    %28 = arith.mulf %21, %5 : vector<16x128xf32>
    %29 = vector.shape_cast %28 : vector<16x128xf32> to vector<2x8x128xf32>
    %cst_10 = arith.constant dense<0.000000e+00> : vector<8x128xf32>
    %30 = vector.multi_reduction <add>, %29, %cst_10 [0] : vector<2x8x128xf32> to vector<8x128xf32>
    %31 = vector.shape_cast %21 : vector<16x128xf32> to vector<2x8x128xf32>
    %cst_11 = arith.constant dense<0.000000e+00> : vector<8x128xf32>
    %32 = vector.multi_reduction <add>, %31, %cst_11 [0] : vector<2x8x128xf32> to vector<8x128xf32>
    %33 = vector.shape_cast %5 : vector<16x128xf32> to vector<2x8x128xf32>
    %cst_12 = arith.constant dense<0.000000e+00> : vector<8x128xf32>
    %34 = vector.multi_reduction <add>, %33, %cst_12 [0] : vector<2x8x128xf32> to vector<8x128xf32>
    %35 = vector.shape_cast %27 : vector<16x128xf32> to vector<2x8x128xf32>
    %cst_13 = arith.constant dense<0.000000e+00> : vector<8x128xf32>
    %36 = vector.multi_reduction <add>, %35, %cst_13 [0] : vector<2x8x128xf32> to vector<8x128xf32>
    %37 = arith.addf %3, %30 : vector<8x128xf32>
    %38 = arith.addf %3, %32 : vector<8x128xf32>
    %39 = arith.addf %3, %34 : vector<8x128xf32>
    %40 = arith.addf %3, %36 : vector<8x128xf32>
    %c0_14 = arith.constant 0 : index
    %c0_15 = arith.constant 0 : index
    %c0_16 = arith.constant 0 : index
    %c0_17 = arith.constant 0 : index
    %41 = vector.load %arg4[%c0_14, %c0_15, %c0_16, %c0_17] : memref<1x4x8x128xf32, #tpu.memory_space<vmem>>, vector<1x1x8x128xf32>
    %42 = vector.shape_cast %41 : vector<1x1x8x128xf32> to vector<8x128xf32>
    %43 = arith.addf %42, %37 : vector<8x128xf32>
    %c0_18 = arith.constant 0 : index
    %c0_19 = arith.constant 0 : index
    %c0_20 = arith.constant 0 : index
    %c0_21 = arith.constant 0 : index
    %44 = vector.load %arg4[%c0_18, %c0_19, %c0_20, %c0_21] : memref<1x4x8x128xf32, #tpu.memory_space<vmem>>, vector<1x1x8x128xf32>
    %45 = vector.shape_cast %44 : vector<1x1x8x128xf32> to vector<8x128xf32>
    %46 = vector.shape_cast %43 : vector<8x128xf32> to vector<1x1x8x128xf32>
    tpu.vector_store %arg4[%c0_18, %c0_19, %c0_20, %c0_21], %46 {strides = array<i32>} : memref<1x4x8x128xf32, #tpu.memory_space<vmem>>, vector<1x1x8x128xf32>,
    %c0_22 = arith.constant 0 : index
    %c1 = arith.constant 1 : index
    %c0_23 = arith.constant 0 : index
    %c0_24 = arith.constant 0 : index
    %47 = vector.load %arg4[%c0_22, %c1, %c0_23, %c0_24] : memref<1x4x8x128xf32, #tpu.memory_space<vmem>>, vector<1x1x8x128xf32>
    %48 = vector.shape_cast %47 : vector<1x1x8x128xf32> to vector<8x128xf32>
    %49 = arith.addf %48, %38 : vector<8x128xf32>
    %c0_25 = arith.constant 0 : index
    %c1_26 = arith.constant 1 : index
    %c0_27 = arith.constant 0 : index
    %c0_28 = arith.constant 0 : index
    %50 = vector.load %arg4[%c0_25, %c1_26, %c0_27, %c0_28] : memref<1x4x8x128xf32, #tpu.memory_space<vmem>>, vector<1x1x8x128xf32>
    %51 = vector.shape_cast %50 : vector<1x1x8x128xf32> to vector<8x128xf32>
    %52 = vector.shape_cast %49 : vector<8x128xf32> to vector<1x1x8x128xf32>
    tpu.vector_store %arg4[%c0_25, %c1_26, %c0_27, %c0_28], %52 {strides = array<i32>} : memref<1x4x8x128xf32, #tpu.memory_space<vmem>>, vector<1x1x8x128xf32>,
    %c0_29 = arith.constant 0 : index
    %c2 = arith.constant 2 : index
    %c0_30 = arith.constant 0 : index
    %c0_31 = arith.constant 0 : index
    %53 = vector.load %arg4[%c0_29, %c2, %c0_30, %c0_31] : memref<1x4x8x128xf32, #tpu.memory_space<vmem>>, vector<1x1x8x128xf32>
    %54 = vector.shape_cast %53 : vector<1x1x8x128xf32> to vector<8x128xf32>
    %55 = arith.addf %54, %39 : vector<8x128xf32>
    %c0_32 = arith.constant 0 : index
    %c2_33 = arith.constant 2 : index
    %c0_34 = arith.constant 0 : index
    %c0_35 = arith.constant 0 : index
    %56 = vector.load %arg4[%c0_32, %c2_33, %c0_34, %c0_35] : memref<1x4x8x128xf32, #tpu.memory_space<vmem>>, vector<1x1x8x128xf32>
    %57 = vector.shape_cast %56 : vector<1x1x8x128xf32> to vector<8x128xf32>
    %58 = vector.shape_cast %55 : vector<8x128xf32> to vector<1x1x8x128xf32>
    tpu.vector_store %arg4[%c0_32, %c2_33, %c0_34, %c0_35], %58 {strides = array<i32>} : memref<1x4x8x128xf32, #tpu.memory_space<vmem>>, vector<1x1x8x128xf32>,
    %c0_36 = arith.constant 0 : index
    %c3 = arith.constant 3 : index
    %c0_37 = arith.constant 0 : index
    %c0_38 = arith.constant 0 : index
    %59 = vector.load %arg4[%c0_36, %c3, %c0_37, %c0_38] : memref<1x4x8x128xf32, #tpu.memory_space<vmem>>, vector<1x1x8x128xf32>
    %60 = vector.shape_cast %59 : vector<1x1x8x128xf32> to vector<8x128xf32>
    %61 = arith.addf %60, %40 : vector<8x128xf32>
    %c0_39 = arith.constant 0 : index
    %c3_40 = arith.constant 3 : index
    %c0_41 = arith.constant 0 : index
    %c0_42 = arith.constant 0 : index
    %62 = vector.load %arg4[%c0_39, %c3_40, %c0_41, %c0_42] : memref<1x4x8x128xf32, #tpu.memory_space<vmem>>, vector<1x1x8x128xf32>
    %63 = vector.shape_cast %62 : vector<1x1x8x128xf32> to vector<8x128xf32>
    %64 = vector.shape_cast %61 : vector<8x128xf32> to vector<1x1x8x128xf32>
    tpu.vector_store %arg4[%c0_39, %c3_40, %c0_41, %c0_42], %64 {strides = array<i32>} : memref<1x4x8x128xf32, #tpu.memory_space<vmem>>, vector<1x1x8x128xf32>,
    return
  }
  func.func @transform_0(%arg0: i32, %arg1: i32) -> (i32, i32) {
    %c1_i32 = arith.constant 1 : i32
    %0 = arith.muli %arg0, %c1_i32 : i32
    %1 = arith.addi %0, %arg1 : i32
    %c0_i32 = arith.constant 0 : i32
    %2 = arith.minsi %1, %c0_i32 : i32
    %c0_i32_0 = arith.constant 0 : i32
    %c0_i32_1 = arith.constant 0 : i32
    return %2, %c0_i32_0 : i32, i32
  }
  func.func @transform_1(%arg0: i32, %arg1: i32) -> (i32, i32) {
    %c1_i32 = arith.constant 1 : i32
    %0 = arith.muli %arg0, %c1_i32 : i32
    %1 = arith.addi %0, %arg1 : i32
    %c0_i32 = arith.constant 0 : i32
    %2 = arith.minsi %1, %c0_i32 : i32
    %c0_i32_0 = arith.constant 0 : i32
    %c0_i32_1 = arith.constant 0 : i32
    return %2, %c0_i32_0 : i32, i32
  }
  func.func @transform_2(%arg0: i32, %arg1: i32) -> (i32, i32, i32, i32) {
    %c0_i32 = arith.constant 0 : i32
    %c0_i32_0 = arith.constant 0 : i32
    %c0_i32_1 = arith.constant 0 : i32
    %c0_i32_2 = arith.constant 0 : i32
    return %arg0, %c0_i32, %c0_i32_0, %c0_i32_1 : i32, i32, i32, i32
  }
}

</mosaic_0001>

<llo_original>
// kernel: tpu_custom_call.1
$region0: #{tpu_custom_call.1}
  #allocation0 [shape = 'u32[]', space=smem, size = 0x4, offset = 0x4, fixed_abs, tag = 'smem constant byte address 0x4 - core index']
  #allocation1 [shape = 'u32[144,128]{1,0:T(1,128)}', space=vmem, size = 0x12000, scoped, tag = 'internal scratch']
  %s0 = inlined_call_operand.hbm [shape: f32[16,128], index: 0, kind: input, shape index: {}]
  %s1 = inlined_call_operand.hbm [shape: f32[16,128], index: 1, kind: input, shape index: {}]
  %s2 = inlined_call_operand.hbm [shape: f32[1,4,8,128], index: 2, kind: output, shape index: {}]
  %s3 = sld [smem:[#allocation0]]
  $region30: #{tpu_custom_call.1} parent=0
    _
  %s5 = ssub.s32 1, %s3
  %s6 = scalar_select 0, %s5, %s3
  $region1: #{tpu_custom_call.1} parent=0
    #allocation2 [shape = 'u8[8192]{0}', space=vmem, size = 0x2000, scoped, tag = 'input window, operand 0, single buffered']
    #allocation3 [shape = 's32[1]{0}', space=sflag, size = 0x4, scoped, tag = 'scoped memory for tpu_custom_call.1']
    #allocation4 [shape = 's32[1]{0}', space=sflag, size = 0x4, scoped, tag = 'scoped memory for tpu_custom_call.1']
    #allocation5 [shape = 'u8[8192]{0}', space=vmem, size = 0x2000, scoped, tag = 'input window, operand 1, single buffered']
    #allocation6 [shape = 's32[1]{0}', space=sflag, size = 0x4, scoped, tag = 'scoped memory for tpu_custom_call.1']
    #allocation7 [shape = 'u8[16384]{0}', space=vmem, size = 0x4000, scoped, tag = 'output window, operand 0, single buffered']
    %7 = vsyncpa [#allocation3], 0
    %8 = vsyncpa [#allocation6], 0
    %9 = vsyncpa [#allocation4], 0
    // Predicated region
    $region2: #{tpu_custom_call.1} parent=1 // pred_check
      _
    $region3: #{tpu_custom_call.1} parent=1 // pred_check_branch
      %11 = sbr.rel (0) target = $region5
    $region4: #{tpu_custom_call.1} parent=1 // pred_region
      %s12 = sadd.s32 0, 0
      %p13 = scmp.lt.s32.totalorder %s12, 0
      %s14 = scalar_select %p13, %s12, 0
      %s15 = smul.u32 2, %s14
      %s17 = ssub.s32 256, 256
      %18 = vsyncadd [#allocation3], %s17
      %s19 = smul.addr %s15, 128
      %s20 = scalar_lea.hbm %s0, %s19
      %s21 = sshll.u32 [#allocation2], 4
      %s22 = int_to_ptr.vmem [resolvable:$true] %s21
      %27 = dma.hbm_to_vmem [thread:$0]  %s20, 256, %s22, [#allocation3], 128, 128, 8
    $region5: #{tpu_custom_call.1} parent=1 // pred_fallthru
      _
    // Predicated region
    $region6: #{tpu_custom_call.1} parent=1 // pred_check
      _
    $region7: #{tpu_custom_call.1} parent=1 // pred_check_branch
      %29 = sbr.rel (0) target = $region9
    $region8: #{tpu_custom_call.1} parent=1 // pred_region
      %s30 = sadd.s32 0, 0
      %p31 = scmp.lt.s32.totalorder %s30, 0
      %s32 = scalar_select %p31, %s30, 0
      %s33 = smul.u32 2, %s32
      %s35 = ssub.s32 256, 256
      %36 = vsyncadd [#allocation6], %s35
      %s37 = smul.addr %s33, 128
      %s38 = scalar_lea.hbm %s1, %s37
      %s39 = sshll.u32 [#allocation5], 4
      %s40 = int_to_ptr.vmem [resolvable:$true] %s39
      %45 = dma.hbm_to_vmem [thread:$0]  %s38, 256, %s40, [#allocation6], 128, 128, 8
    $region9: #{tpu_custom_call.1} parent=1 // pred_fallthru
      _
    // Predicated region
    $region10: #{tpu_custom_call.1} parent=1 // pred_check
      _
    $region11: #{tpu_custom_call.1} parent=1 // pred_check_branch
      %47 = sbr.rel (0) target = $region13
    $region12: #{tpu_custom_call.1} parent=1 // pred_region
      %48 = dma.done [#allocation3], 256
    $region13: #{tpu_custom_call.1} parent=1 // pred_fallthru
      _
    // Predicated region
    $region14: #{tpu_custom_call.1} parent=1 // pred_check
      _
    $region15: #{tpu_custom_call.1} parent=1 // pred_check_branch
      %50 = sbr.rel (0) target = $region17
    $region16: #{tpu_custom_call.1} parent=1 // pred_region
      %51 = dma.done [#allocation6], 256
    $region17: #{tpu_custom_call.1} parent=1 // pred_fallthru
      _
    %s52 = sadd.s32 0, 0
    %p53 = scmp.lt.s32.totalorder %s52, 0
    %s54 = scalar_select %p53, %s52, 0
    %s55 = smul.u32 2, %s54
    %s56 = sadd.s32 0, 0
    %p57 = scmp.lt.s32.totalorder %s56, 0
    %s58 = scalar_select %p57, %s56, 0
    %s59 = smul.u32 2, %s58
    %p60 = scmp.eq.s32.totalorder 0, 0
    // Predicated region
    $region18: #{tpu_custom_call.1} parent=1 // pred_check
      %p61 = pneg %p60
    $region19: #{tpu_custom_call.1} parent=1 // pred_check_branch
      %63 = sbr.rel (%p61) target = $region21
    $region20: #{tpu_custom_call.1} parent=1 // pred_region
      %64 = vst [vmem:[#allocation7] sm:$0xff] 0.0
      %65 = vst [vmem:[#allocation7 + $0x8] sm:$0xff] 0.0
      %66 = vst [vmem:[#allocation7 + $0x10] sm:$0xff] 0.0
      %67 = vst [vmem:[#allocation7 + $0x18] sm:$0xff] 0.0
    $region21: #{tpu_custom_call.1} parent=1 // pred_fallthru
      _
    %v68 = vld [vmem:[#allocation2] sm:$0xff]
    %v69 = vld [vmem:[#allocation2 + $0x8] sm:$0xff]
    %v70 = vld [vmem:[#allocation5] sm:$0xff]
    %v71 = vld [vmem:[#allocation5 + $0x8] sm:$0xff]
    %v72 = vand.u32 2147483647, %v68
    %v73 = vand.u32 2147483647, %v69
    %v74 = vsub.f32 0.0, %v72
    %v75 = vsub.f32 0.0, %v73
    %v76 = vmul.f32 %v74, 1.442695
    %v77 = vpow.pop %v76
    %v78 = vmul.f32 %v75, 1.442695
    %v79 = vpow.pop %v78
    %v80 = vadd.f32 %v77, 1.0
    %v81 = vadd.f32 %v79, 1.0
    %v82 = vrcp.pop %v80
    %v83 = vrcp.pop %v81
    %v84 = vmul.f32 %v80, %v82
    %v85 = vmul.f32 %v81, %v83
    %v86 = vsub.f32 2.0, %v84
    %v87 = vsub.f32 2.0, %v85
    %v88 = vmul.f32 %v82, %v86
    %v89 = vmul.f32 %v83, %v87
    %vm90 = vcmp.ge.f32.partialorder %v68, 0.0
    %vm91 = vcmp.ge.f32.partialorder %v69, 0.0
    %v92 = vsel %vm90, 1.0, %v77
    %v93 = vsel %vm91, 1.0, %v79
    %v94 = vmul.f32 %v92, %v88
    %v95 = vmul.f32 %v93, %v89
    %v96 = vmax.f32 %v68, 0.0
    %v97 = vmax.f32 %v69, 0.0
    %v98 = vmul.f32 %v68, %v70
    %v99 = vmul.f32 %v69, %v71
    %v100 = vsub.f32 %v96, %v98
    %v101 = vsub.f32 %v97, %v99
    %v102 = vadd.f32 %v77, 1.0
    %v103 = vlog2.pop %v102
    %v104 = vmul.f32 %v103, 0.6931472
    %v105 = vmul.f32 -0.5, %v77
    %v106 = vadd.f32 %v105, 1.0
    %v107 = vmul.f32 %v106, %v77
    %v108 = vand.u32 2147483647, %v77
    %vm109 = vcmp.lt.f32.partialorder %v108, 0.0004427343
    %v110 = vsel %vm109, %v107, %v104
    %v111 = vadd.f32 %v79, 1.0
    %v112 = vlog2.pop %v111
    %v113 = vmul.f32 %v112, 0.6931472
    %v114 = vmul.f32 -0.5, %v79
    %v115 = vadd.f32 %v114, 1.0
    %v116 = vmul.f32 %v115, %v79
    %v117 = vand.u32 2147483647, %v79
    %vm118 = vcmp.lt.f32.partialorder %v117, 0.0004427343
    %v119 = vsel %vm118, %v116, %v113
    %v120 = vadd.f32 %v100, %v110
    %v121 = vadd.f32 %v101, %v119
    %v122 = vmul.f32 %v94, %v70
    %v123 = vmul.f32 %v95, %v71
    %v124 = vadd.f32 %v122, %v123
    %v125 = vadd.f32 %v94, %v95
    %v126 = vadd.f32 %v70, %v71
    %v127 = vadd.f32 %v120, %v121
    %v128 = vadd.f32 %v124, 0.0
    %v129 = vadd.f32 %v125, 0.0
    %v130 = vadd.f32 %v126, 0.0
    %v131 = vadd.f32 %v127, 0.0
    %v132 = vld [vmem:[#allocation7] sm:$0xff]
    %v133 = vadd.f32 %v132, %v128
    %134 = vst [vmem:[#allocation7] sm:$0xff] %v133
    %s135 = scalar_lea.vmem [#allocation7], 8
    %v136 = vld [vmem:[%s135] sm:$0xff]
    %v137 = vadd.f32 %v136, %v129
    %138 = vst [vmem:[%s135] sm:$0xff] %v137
    %s139 = scalar_lea.vmem [#allocation7], 16
    %v140 = vld [vmem:[%s139] sm:$0xff]
    %v141 = vadd.f32 %v140, %v130
    %142 = vst [vmem:[%s139] sm:$0xff] %v141
    %s143 = scalar_lea.vmem [#allocation7], 24
    %v144 = vld [vmem:[%s143] sm:$0xff]
    %v145 = vadd.f32 %v144, %v131
    %146 = vst [vmem:[%s143] sm:$0xff] %v145
    // Predicated region
    $region22: #{tpu_custom_call.1} parent=1 // pred_check
      _
    $region23: #{tpu_custom_call.1} parent=1 // pred_check_branch
      %148 = sbr.rel (0) target = $region25
    $region24: #{tpu_custom_call.1} parent=1 // pred_region
      %s150 = ssub.s32 512, 512
      %151 = vsyncadd [#allocation4], %s150
      %s152 = sshll.u32 [#allocation7], 4
      %s153 = int_to_ptr.vmem [resolvable:$true] %s152
      %158 = dma.vmem_to_hbm [thread:$0]  %s153, 512, %s2, [#allocation4], 128, 128, 8
    $region25: #{tpu_custom_call.1} parent=1 // pred_fallthru
      _
    // Predicated region
    $region26: #{tpu_custom_call.1} parent=1 // pred_check
      _
    $region27: #{tpu_custom_call.1} parent=1 // pred_check_branch
      %160 = sbr.rel (0) target = $region29
    $region28: #{tpu_custom_call.1} parent=1 // pred_region
      %161 = dma.done [#allocation4], 512
    $region29: #{tpu_custom_call.1} parent=1 // pred_fallthru
      _
    %162 = vsyncpa [#allocation3], 1
    %163 = vsyncpa [#allocation6], 1
    %164 = vsyncpa [#allocation4], 1

</llo_original>
